<compile_context>
chip_gen: v5e
topology: v5e:2x2
jax: 0.10.0
libtpu: 0.0.40
codegen_flags: <defaults>
</compile_context>

<pallas_src>
import functools
import math

import jax
import jax.numpy as jnp
from jax.experimental import pallas as pl
from jax.experimental.pallas import tpu as pltpu

NEG_INF = -1e30  # used instead of -inf in the causal mask (same softmax result)
LN_EPS = 1e-5


# ---------------------------------------------------------------------------
# Kernel: one full transformer block for a single sequence (one grid step).
# ---------------------------------------------------------------------------
def _transformer_block_kernel(x_ref, mask_ref,
                              ln1_g_ref, ln1_b_ref,
                              wqkv_ref, bqkv_ref, wo_ref, bo_ref,
                              ln2_g_ref, ln2_b_ref,
                              w1_ref, b1_ref, w2_ref, b2_ref,
                              out_ref, *, num_heads):
    x = x_ref[0]                      # (L, D)
    L, D = x.shape
    head_dim = D // num_heads
    scale = 1.0 / math.sqrt(head_dim)

    def layernorm(v, g, b):
        mu = jnp.mean(v, axis=-1, keepdims=True)
        var = jnp.mean((v - mu) ** 2, axis=-1, keepdims=True)
        return (v - mu) * jax.lax.rsqrt(var + LN_EPS) * g + b

    # ---- LN1 + multi-head self-attention -------------------------------
    x_ln1 = layernorm(x, ln1_g_ref[...], ln1_b_ref[...])

    # Fused QKV projection: one (L,D) @ (D,3D) matmul.
    qkv = jnp.dot(x_ln1, wqkv_ref[...],
                  preferred_element_type=jnp.float32) + bqkv_ref[...]
    q = qkv[:, 0:D]
    k = qkv[:, D:2 * D]
    v = qkv[:, 2 * D:3 * D]

    mask = mask_ref[...]              # (L, L), additive
    attn_acc = jnp.zeros((L, D), jnp.float32)
    for h in range(num_heads):        # static unrolled loop (num_heads small)
        lo, hi = h * head_dim, (h + 1) * head_dim
        qh = q[:, lo:hi]
        kh = k[:, lo:hi]
        vh = v[:, lo:hi]
        # scores = qh @ kh^T  (contract last dims, no explicit transpose)
        scores = jax.lax.dot_general(
            qh, kh, (((1,), (1,)), ((), ())),
            preferred_element_type=jnp.float32) * scale + mask
        scores = scores - jnp.max(scores, axis=-1, keepdims=True)
        e = jnp.exp(scores)
        probs = e / jnp.sum(e, axis=-1, keepdims=True)
        oh = jnp.dot(probs, vh, preferred_element_type=jnp.float32)  # (L, Dh)
        # Apply the output projection per head (split-weight form) so no
        # concatenation of head outputs is needed in-kernel.
        attn_acc = attn_acc + jnp.dot(oh, wo_ref[lo:hi, :],
                                      preferred_element_type=jnp.float32)
    attn = attn_acc + bo_ref[...]

    x = x + attn                      # residual 1

    # ---- LN2 + FFN ------------------------------------------------------
    x_ln2 = layernorm(x, ln2_g_ref[...], ln2_b_ref[...])
    h1 = jnp.dot(x_ln2, w1_ref[...],
                 preferred_element_type=jnp.float32) + b1_ref[...]
    h1 = jax.nn.gelu(h1, approximate=True)
    ffn = jnp.dot(h1, w2_ref[...],
                  preferred_element_type=jnp.float32) + b2_ref[...]

    out_ref[0] = (x + ffn).astype(out_ref.dtype)   # residual 2, dense store


# ---------------------------------------------------------------------------
# Wrapper: grid over sequences, weights replicated via constant index_map.
# ---------------------------------------------------------------------------
def transformer_block_forward(x, p, mask, num_heads):
    B, L, D = x.shape
    flat = [p["ln1_g"], p["ln1_b"],
            p["w_qkv"], p["b_qkv"], p["w_o"], p["b_o"],
            p["ln2_g"], p["ln2_b"],
            p["w1"], p["b1"], p["w2"], p["b2"]]

    const_specs = [
        pl.BlockSpec(a.shape, lambda i, n=a.ndim: (0,) * n)
        for a in [mask] + flat
    ]
    kernel = functools.partial(_transformer_block_kernel, num_heads=num_heads)

    return pl.pallas_call(
        kernel,
        grid=(B,),
        in_specs=[pl.BlockSpec((1, L, D), lambda i: (i, 0, 0))] + const_specs,
        out_specs=pl.BlockSpec((1, L, D), lambda i: (i, 0, 0)),
        out_shape=jax.ShapeDtypeStruct((B, L, D), jnp.float32),
        compiler_params=pltpu.CompilerParams(
            dimension_semantics=("parallel",)),
    )(x, mask, *flat)


def _causal_mask(n):
    tri = jnp.triu(jnp.ones((n, n), jnp.float32), k=1)
    return jnp.where(tri > 0, NEG_INF, 0.0).astype(jnp.float32)


def enhanced_block_forward(inner_tokens, params, config):
    K = config["context_len_outer"]
    Li = config["context_len_inner"] + 1
    D = config["embed_dim_inner"]

    inner_mask = jnp.zeros((Li, Li), jnp.float32)
    outer_mask = _causal_mask(K)

    inner_out = transformer_block_forward(
        inner_tokens, params["inner"], inner_mask, config["num_heads_inner"])

    # temp = inner_outputs.view(-1, K, Li, D); outer_tokens = temp[:, :, 0, :]
    outer_tokens = inner_out.reshape(-1, K, Li, D)[:, :, 0, :]

    outer_out = transformer_block_forward(
        outer_tokens, params["outer"], outer_mask, config["num_heads_outer"])
    return inner_out, outer_out


# ---------------------------------------------------------------------------
# Parameter init (weights stored (in_dim, out_dim); biases as (1, out_dim)).
# ---------------------------------------------------------------------------
def init_block_params(key, embed_dim, expand):
    D, E = embed_dim, expand
    keys = jax.random.split(key, 12)

    def linear(kw, kb, fin, fout):
        bound = 1.0 / math.sqrt(fin)
        w = jax.random.uniform(kw, (fin, fout), jnp.float32, -bound, bound)
        b = jax.random.uniform(kb, (1, fout), jnp.float32, -bound, bound)
        return w, b

    w_qkv, b_qkv = linear(keys[0], keys[1], D, 3 * D)
    w_o, b_o = linear(keys[2], keys[3], D, D)
    w1, b1 = linear(keys[4], keys[5], D, E * D)
    w2, b2 = linear(keys[6], keys[7], E * D, D)
    ln1_g = 1.0 + 0.1 * jax.random.normal(keys[8], (1, D), jnp.float32)
    ln1_b = 0.1 * jax.random.normal(keys[9], (1, D), jnp.float32)
    ln2_g = 1.0 + 0.1 * jax.random.normal(keys[10], (1, D), jnp.float32)
    ln2_b = 0.1 * jax.random.normal(keys[11], (1, D), jnp.float32)
    return dict(ln1_g=ln1_g, ln1_b=ln1_b,
                w_qkv=w_qkv, b_qkv=b_qkv, w_o=w_o, b_o=b_o,
                ln2_g=ln2_g, ln2_b=ln2_b,
                w1=w1, b1=b1, w2=w2, b2=b2)


# ---------------------------------------------------------------------------
# Pure-JAX reference matching the PyTorch forward (eval mode, dropout off).
# ---------------------------------------------------------------------------
def transformer_block_reference(x, p, mask, num_heads):
    B, L, D = x.shape
    Dh = D // num_heads
    scale = 1.0 / math.sqrt(Dh)

    def layernorm(v, g, b):
        mu = jnp.mean(v, axis=-1, keepdims=True)
        var = jnp.mean((v - mu) ** 2, axis=-1, keepdims=True)
        return (v - mu) * jax.lax.rsqrt(var + LN_EPS) * g + b

    x_ln1 = layernorm(x, p["ln1_g"], p["ln1_b"])
    qkv = x_ln1 @ p["w_qkv"] + p["b_qkv"]
    q, k, v = jnp.split(qkv, 3, axis=-1)
    q = q.reshape(B, L, num_heads, Dh).transpose(0, 2, 1, 3)
    k = k.reshape(B, L, num_heads, Dh).transpose(0, 2, 1, 3)
    v = v.reshape(B, L, num_heads, Dh).transpose(0, 2, 1, 3)
    scores = jnp.einsum("bhqd,bhkd->bhqk", q, k) * scale + mask
    probs = jax.nn.softmax(scores, axis=-1)
    attn = jnp.einsum("bhqk,bhkd->bhqd", probs, v)
    attn = attn.transpose(0, 2, 1, 3).reshape(B, L, D)
    attn = attn @ p["w_o"] + p["b_o"]
    x = x + attn
    x_ln2 = layernorm(x, p["ln2_g"], p["ln2_b"])
    h = jax.nn.gelu(x_ln2 @ p["w1"] + p["b1"], approximate=True)
    return x + (h @ p["w2"] + p["b2"])


def enhanced_block_reference(inner_tokens, params, config):
    K = config["context_len_outer"]
    Li = config["context_len_inner"] + 1
    D = config["embed_dim_inner"]
    inner_mask = jnp.zeros((Li, Li), jnp.float32)
    outer_mask = _causal_mask(K)
    inner_out = transformer_block_reference(
        inner_tokens, params["inner"], inner_mask, config["num_heads_inner"])
    outer_tokens = inner_out.reshape(-1, K, Li, D)[:, :, 0, :]
    outer_out = transformer_block_reference(
        outer_tokens, params["outer"], outer_mask, config["num_heads_outer"])
    return inner_out, outer_out


if __name__ == "__main__":
    key = jax.random.PRNGKey(0)
    k_x, k_in, k_out = jax.random.split(key, 3)

    config = dict(
        embed_dim_inner=32, num_heads_inner=2,
        embed_dim_outer=32, num_heads_outer=2,
        context_len_inner=7, context_len_outer=4,
        dim_expand_inner=4, dim_expand_outer=4,
    )
    batch_outer = 2
    K = config["context_len_outer"]
    Li = config["context_len_inner"] + 1
    D = config["embed_dim_inner"]

    inner_tokens = jax.random.normal(k_x, (batch_outer * K, Li, D), jnp.float32)
    params = dict(
        inner=init_block_params(k_in, D, config["dim_expand_inner"]),
        outer=init_block_params(k_out, config["embed_dim_outer"],
                                config["dim_expand_outer"]),
    )

    inner_out, outer_out = enhanced_block_forward(inner_tokens, params, config)
    jax.block_until_ready((inner_out, outer_out))

    ref_inner, ref_outer = enhanced_block_reference(inner_tokens, params, config)
    assert inner_out.shape == (batch_outer * K, Li, D)
    assert outer_out.shape == (batch_outer, K, D)
    assert jnp.allclose(inner_out, ref_inner, atol=1e-4, rtol=1e-4)
    assert jnp.allclose(outer_out, ref_outer, atol=1e-4, rtol=1e-4)

    print("KERNEL_OK")
</pallas_src>

<mosaic_0001>
module attributes {stable_mosaic.version = 11 : i64} {
  func.func @_transformer_block_kernel(%arg0: i32, %arg1: memref<1x8x32xf32, #tpu.memory_space<vmem>>, %arg2: memref<8x8xf32, #tpu.memory_space<vmem>>, %arg3: memref<1x32xf32, #tpu.memory_space<vmem>>, %arg4: memref<1x32xf32, #tpu.memory_space<vmem>>, %arg5: memref<32x96xf32, #tpu.memory_space<vmem>>, %arg6: memref<1x96xf32, #tpu.memory_space<vmem>>, %arg7: memref<32x32xf32, #tpu.memory_space<vmem>>, %arg8: memref<1x32xf32, #tpu.memory_space<vmem>>, %arg9: memref<1x32xf32, #tpu.memory_space<vmem>>, %arg10: memref<1x32xf32, #tpu.memory_space<vmem>>, %arg11: memref<32x128xf32, #tpu.memory_space<vmem>>, %arg12: memref<1x128xf32, #tpu.memory_space<vmem>>, %arg13: memref<128x32xf32, #tpu.memory_space<vmem>>, %arg14: memref<1x32xf32, #tpu.memory_space<vmem>>, %arg15: memref<1x8x32xf32, #tpu.memory_space<vmem>>) attributes {dimension_semantics = [#tpu.dimension_semantics<parallel>], iteration_bounds = array<i64: 8>, scalar_prefetch = 0 : i64, scratch_operands = 0 : i64, tpu.core_type = #tpu.core_type<tc>, window_params = [{transform_indices = @transform_0, window_bounds = array<i64: 1, 8, 32>}, {pipeline_mode = #tpu.pipeline_mode<synchronous>, transform_indices = @transform_1, window_bounds = array<i64: 8, 8>}, {pipeline_mode = #tpu.pipeline_mode<synchronous>, transform_indices = @transform_2, window_bounds = array<i64: 1, 32>}, {pipeline_mode = #tpu.pipeline_mode<synchronous>, transform_indices = @transform_3, window_bounds = array<i64: 1, 32>}, {pipeline_mode = #tpu.pipeline_mode<synchronous>, transform_indices = @transform_4, window_bounds = array<i64: 32, 96>}, {pipeline_mode = #tpu.pipeline_mode<synchronous>, transform_indices = @transform_5, window_bounds = array<i64: 1, 96>}, {pipeline_mode = #tpu.pipeline_mode<synchronous>, transform_indices = @transform_6, window_bounds = array<i64: 32, 32>}, {pipeline_mode = #tpu.pipeline_mode<synchronous>, transform_indices = @transform_7, window_bounds = array<i64: 1, 32>}, {pipeline_mode = #tpu.pipeline_mode<synchronous>, transform_indices = @transform_8, window_bounds = array<i64: 1, 32>}, {pipeline_mode = #tpu.pipeline_mode<synchronous>, transform_indices = @transform_9, window_bounds = array<i64: 1, 32>}, {pipeline_mode = #tpu.pipeline_mode<synchronous>, transform_indices = @transform_10, window_bounds = array<i64: 32, 128>}, {pipeline_mode = #tpu.pipeline_mode<synchronous>, transform_indices = @transform_11, window_bounds = array<i64: 1, 128>}, {pipeline_mode = #tpu.pipeline_mode<synchronous>, transform_indices = @transform_12, window_bounds = array<i64: 128, 32>}, {pipeline_mode = #tpu.pipeline_mode<synchronous>, transform_indices = @transform_13, window_bounds = array<i64: 1, 32>}, {transform_indices = @transform_14, window_bounds = array<i64: 1, 8, 32>}]} {
    %c0 = arith.constant 0 : index
    %c0_0 = arith.constant 0 : index
    %c0_1 = arith.constant 0 : index
    %0 = vector.load %arg1[%c0, %c0_0, %c0_1] : memref<1x8x32xf32, #tpu.memory_space<vmem>>, vector<1x8x32xf32>
    %1 = vector.shape_cast %0 : vector<1x8x32xf32> to vector<8x32xf32>
    %c0_2 = arith.constant 0 : index
    %c0_3 = arith.constant 0 : index
    %2 = vector.load %arg3[%c0_2, %c0_3] : memref<1x32xf32, #tpu.memory_space<vmem>>, vector<1x32xf32>
    %c0_4 = arith.constant 0 : index
    %c0_5 = arith.constant 0 : index
    %3 = vector.load %arg4[%c0_4, %c0_5] : memref<1x32xf32, #tpu.memory_space<vmem>>, vector<1x32xf32>
    %cst = arith.constant dense<0.000000e+00> : vector<8xf32>
    %4 = vector.multi_reduction <add>, %1, %cst [1] : vector<8x32xf32> to vector<8xf32>
    %5 = vector.shape_cast %4 : vector<8xf32> to vector<8x1xf32>
    %cst_6 = arith.constant 3.200000e+01 : f32
    %6 = vector.broadcast %cst_6 : f32 to vector<8x1xf32>
    %7 = arith.divf %5, %6 : vector<8x1xf32>
    %8 = vector.broadcast %7 : vector<8x1xf32> to vector<8x32xf32>
    %9 = arith.subf %1, %8 : vector<8x32xf32>
    %10 = arith.mulf %9, %9 : vector<8x32xf32>
    %cst_7 = arith.constant dense<0.000000e+00> : vector<8xf32>
    %11 = vector.multi_reduction <add>, %10, %cst_7 [1] : vector<8x32xf32> to vector<8xf32>
    %12 = vector.shape_cast %11 : vector<8xf32> to vector<8x1xf32>
    %cst_8 = arith.constant 3.200000e+01 : f32
    %13 = vector.broadcast %cst_8 : f32 to vector<8x1xf32>
    %14 = arith.divf %12, %13 : vector<8x1xf32>
    %15 = vector.broadcast %7 : vector<8x1xf32> to vector<8x32xf32>
    %16 = arith.subf %1, %15 : vector<8x32xf32>
    %cst_9 = arith.constant 9.99999974E-6 : f32
    %17 = vector.broadcast %cst_9 : f32 to vector<8x1xf32>
    %18 = arith.addf %14, %17 : vector<8x1xf32>
    %19 = math.rsqrt %18 : vector<8x1xf32>
    %20 = vector.broadcast %19 : vector<8x1xf32> to vector<8x32xf32>
    %21 = arith.mulf %16, %20 : vector<8x32xf32>
    %22 = vector.broadcast %2 : vector<1x32xf32> to vector<8x32xf32>
    %23 = arith.mulf %21, %22 : vector<8x32xf32>
    %24 = vector.broadcast %3 : vector<1x32xf32> to vector<8x32xf32>
    %25 = arith.addf %23, %24 : vector<8x32xf32>
    %c0_10 = arith.constant 0 : index
    %c0_11 = arith.constant 0 : index
    %26 = vector.load %arg5[%c0_10, %c0_11] : memref<32x96xf32, #tpu.memory_space<vmem>>, vector<32x96xf32>
    %cst_12 = arith.constant dense<0.000000e+00> : vector<8x96xf32>
    %27 = tpu.matmul %25, %26, %cst_12 {dimension_numbers = #tpu.dot_dimension_numbers<[1], [0], [0], [1], [0, 0, 1, 1], [], []>} : vector<8x32xf32>, vector<32x96xf32>, vector<8x96xf32> -> vector<8x96xf32>
    %c0_13 = arith.constant 0 : index
    %c0_14 = arith.constant 0 : index
    %28 = vector.load %arg6[%c0_13, %c0_14] : memref<1x96xf32, #tpu.memory_space<vmem>>, vector<1x96xf32>
    %29 = vector.broadcast %28 : vector<1x96xf32> to vector<8x96xf32>
    %30 = arith.addf %27, %29 : vector<8x96xf32>
    %31 = vector.extract_strided_slice %30 {offsets = [0, 0], sizes = [8, 32], strides = [1, 1]} : vector<8x96xf32> to vector<8x32xf32>
    %32 = vector.extract_strided_slice %30 {offsets = [0, 32], sizes = [8, 32], strides = [1, 1]} : vector<8x96xf32> to vector<8x32xf32>
    %33 = vector.extract_strided_slice %30 {offsets = [0, 64], sizes = [8, 32], strides = [1, 1]} : vector<8x96xf32> to vector<8x32xf32>
    %c0_15 = arith.constant 0 : index
    %c0_16 = arith.constant 0 : index
    %34 = vector.load %arg2[%c0_15, %c0_16] : memref<8x8xf32, #tpu.memory_space<vmem>>, vector<8x8xf32>
    %cst_17 = arith.constant 0.000000e+00 : f32
    %35 = vector.broadcast %cst_17 : f32 to vector<8x32xf32>
    %36 = vector.extract_strided_slice %31 {offsets = [0, 0], sizes = [8, 16], strides = [1, 1]} : vector<8x32xf32> to vector<8x16xf32>
    %37 = vector.extract_strided_slice %32 {offsets = [0, 0], sizes = [8, 16], strides = [1, 1]} : vector<8x32xf32> to vector<8x16xf32>
    %38 = vector.extract_strided_slice %33 {offsets = [0, 0], sizes = [8, 16], strides = [1, 1]} : vector<8x32xf32> to vector<8x16xf32>
    %cst_18 = arith.constant dense<0.000000e+00> : vector<8x8xf32>
    %39 = tpu.matmul %36, %37, %cst_18 {dimension_numbers = #tpu.dot_dimension_numbers<[1], [1], [0], [0], [0, 0, 1, 0], [], []>} : vector<8x16xf32>, vector<8x16xf32>, vector<8x8xf32> -> vector<8x8xf32>
    %cst_19 = arith.constant 2.500000e-01 : f32
    %40 = vector.broadcast %cst_19 : f32 to vector<8x8xf32>
    %41 = arith.mulf %39, %40 : vector<8x8xf32>
    %42 = arith.addf %41, %34 : vector<8x8xf32>
    %cst_20 = arith.constant dense<0xFF800000> : vector<8xf32>
    %43 = vector.multi_reduction <maximumf>, %42, %cst_20 [1] : vector<8x8xf32> to vector<8xf32>
    %44 = vector.shape_cast %43 : vector<8xf32> to vector<8x1xf32>
    %45 = vector.broadcast %44 : vector<8x1xf32> to vector<8x8xf32>
    %46 = arith.subf %42, %45 : vector<8x8xf32>
    %47 = math.exp %46 : vector<8x8xf32>
    %cst_21 = arith.constant dense<0.000000e+00> : vector<8xf32>
    %48 = vector.multi_reduction <add>, %47, %cst_21 [1] : vector<8x8xf32> to vector<8xf32>
    %49 = vector.shape_cast %48 : vector<8xf32> to vector<8x1xf32>
    %50 = vector.broadcast %49 : vector<8x1xf32> to vector<8x8xf32>
    %51 = arith.divf %47, %50 : vector<8x8xf32>
    %cst_22 = arith.constant dense<0.000000e+00> : vector<8x16xf32>
    %52 = tpu.matmul %51, %38, %cst_22 {dimension_numbers = #tpu.dot_dimension_numbers<[1], [0], [0], [1], [0, 0, 1, 1], [], []>} : vector<8x8xf32>, vector<8x16xf32>, vector<8x16xf32> -> vector<8x16xf32>
    %c0_23 = arith.constant 0 : index
    %c0_24 = arith.constant 0 : index
    %53 = vector.load %arg7[%c0_23, %c0_24] : memref<32x32xf32, #tpu.memory_space<vmem>>, vector<16x32xf32>
    %cst_25 = arith.constant dense<0.000000e+00> : vector<8x32xf32>
    %54 = tpu.matmul %52, %53, %cst_25 {dimension_numbers = #tpu.dot_dimension_numbers<[1], [0], [0], [1], [0, 0, 1, 1], [], []>} : vector<8x16xf32>, vector<16x32xf32>, vector<8x32xf32> -> vector<8x32xf32>
    %55 = arith.addf %35, %54 : vector<8x32xf32>
    %56 = vector.extract_strided_slice %31 {offsets = [0, 16], sizes = [8, 16], strides = [1, 1]} : vector<8x32xf32> to vector<8x16xf32>
    %57 = vector.extract_strided_slice %32 {offsets = [0, 16], sizes = [8, 16], strides = [1, 1]} : vector<8x32xf32> to vector<8x16xf32>
    %58 = vector.extract_strided_slice %33 {offsets = [0, 16], sizes = [8, 16], strides = [1, 1]} : vector<8x32xf32> to vector<8x16xf32>
    %cst_26 = arith.constant dense<0.000000e+00> : vector<8x8xf32>
    %59 = tpu.matmul %56, %57, %cst_26 {dimension_numbers = #tpu.dot_dimension_numbers<[1], [1], [0], [0], [0, 0, 1, 0], [], []>} : vector<8x16xf32>, vector<8x16xf32>, vector<8x8xf32> -> vector<8x8xf32>
    %cst_27 = arith.constant 2.500000e-01 : f32
    %60 = vector.broadcast %cst_27 : f32 to vector<8x8xf32>
    %61 = arith.mulf %59, %60 : vector<8x8xf32>
    %62 = arith.addf %61, %34 : vector<8x8xf32>
    %cst_28 = arith.constant dense<0xFF800000> : vector<8xf32>
    %63 = vector.multi_reduction <maximumf>, %62, %cst_28 [1] : vector<8x8xf32> to vector<8xf32>
    %64 = vector.shape_cast %63 : vector<8xf32> to vector<8x1xf32>
    %65 = vector.broadcast %64 : vector<8x1xf32> to vector<8x8xf32>
    %66 = arith.subf %62, %65 : vector<8x8xf32>
    %67 = math.exp %66 : vector<8x8xf32>
    %cst_29 = arith.constant dense<0.000000e+00> : vector<8xf32>
    %68 = vector.multi_reduction <add>, %67, %cst_29 [1] : vector<8x8xf32> to vector<8xf32>
    %69 = vector.shape_cast %68 : vector<8xf32> to vector<8x1xf32>
    %70 = vector.broadcast %69 : vector<8x1xf32> to vector<8x8xf32>
    %71 = arith.divf %67, %70 : vector<8x8xf32>
    %cst_30 = arith.constant dense<0.000000e+00> : vector<8x16xf32>
    %72 = tpu.matmul %71, %58, %cst_30 {dimension_numbers = #tpu.dot_dimension_numbers<[1], [0], [0], [1], [0, 0, 1, 1], [], []>} : vector<8x8xf32>, vector<8x16xf32>, vector<8x16xf32> -> vector<8x16xf32>
    %c16 = arith.constant 16 : index
    %c0_31 = arith.constant 0 : index
    %73 = vector.load %arg7[%c16, %c0_31] : memref<32x32xf32, #tpu.memory_space<vmem>>, vector<16x32xf32>
    %cst_32 = arith.constant dense<0.000000e+00> : vector<8x32xf32>
    %74 = tpu.matmul %72, %73, %cst_32 {dimension_numbers = #tpu.dot_dimension_numbers<[1], [0], [0], [1], [0, 0, 1, 1], [], []>} : vector<8x16xf32>, vector<16x32xf32>, vector<8x32xf32> -> vector<8x32xf32>
    %75 = arith.addf %55, %74 : vector<8x32xf32>
    %c0_33 = arith.constant 0 : index
    %c0_34 = arith.constant 0 : index
    %76 = vector.load %arg8[%c0_33, %c0_34] : memref<1x32xf32, #tpu.memory_space<vmem>>, vector<1x32xf32>
    %77 = vector.broadcast %76 : vector<1x32xf32> to vector<8x32xf32>
    %78 = arith.addf %75, %77 : vector<8x32xf32>
    %79 = arith.addf %1, %78 : vector<8x32xf32>
    %c0_35 = arith.constant 0 : index
    %c0_36 = arith.constant 0 : index
    %80 = vector.load %arg9[%c0_35, %c0_36] : memref<1x32xf32, #tpu.memory_space<vmem>>, vector<1x32xf32>
    %c0_37 = arith.constant 0 : index
    %c0_38 = arith.constant 0 : index
    %81 = vector.load %arg10[%c0_37, %c0_38] : memref<1x32xf32, #tpu.memory_space<vmem>>, vector<1x32xf32>
    %cst_39 = arith.constant dense<0.000000e+00> : vector<8xf32>
    %82 = vector.multi_reduction <add>, %79, %cst_39 [1] : vector<8x32xf32> to vector<8xf32>
    %83 = vector.shape_cast %82 : vector<8xf32> to vector<8x1xf32>
    %cst_40 = arith.constant 3.200000e+01 : f32
    %84 = vector.broadcast %cst_40 : f32 to vector<8x1xf32>
    %85 = arith.divf %83, %84 : vector<8x1xf32>
    %86 = vector.broadcast %85 : vector<8x1xf32> to vector<8x32xf32>
    %87 = arith.subf %79, %86 : vector<8x32xf32>
    %88 = arith.mulf %87, %87 : vector<8x32xf32>
    %cst_41 = arith.constant dense<0.000000e+00> : vector<8xf32>
    %89 = vector.multi_reduction <add>, %88, %cst_41 [1] : vector<8x32xf32> to vector<8xf32>
    %90 = vector.shape_cast %89 : vector<8xf32> to vector<8x1xf32>
    %cst_42 = arith.constant 3.200000e+01 : f32
    %91 = vector.broadcast %cst_42 : f32 to vector<8x1xf32>
    %92 = arith.divf %90, %91 : vector<8x1xf32>
    %93 = vector.broadcast %85 : vector<8x1xf32> to vector<8x32xf32>
    %94 = arith.subf %79, %93 : vector<8x32xf32>
    %cst_43 = arith.constant 9.99999974E-6 : f32
    %95 = vector.broadcast %cst_43 : f32 to vector<8x1xf32>
    %96 = arith.addf %92, %95 : vector<8x1xf32>
    %97 = math.rsqrt %96 : vector<8x1xf32>
    %98 = vector.broadcast %97 : vector<8x1xf32> to vector<8x32xf32>
    %99 = arith.mulf %94, %98 : vector<8x32xf32>
    %100 = vector.broadcast %80 : vector<1x32xf32> to vector<8x32xf32>
    %101 = arith.mulf %99, %100 : vector<8x32xf32>
    %102 = vector.broadcast %81 : vector<1x32xf32> to vector<8x32xf32>
    %103 = arith.addf %101, %102 : vector<8x32xf32>
    %c0_44 = arith.constant 0 : index
    %c0_45 = arith.constant 0 : index
    %104 = vector.load %arg11[%c0_44, %c0_45] : memref<32x128xf32, #tpu.memory_space<vmem>>, vector<32x128xf32>
    %cst_46 = arith.constant dense<0.000000e+00> : vector<8x128xf32>
    %105 = tpu.matmul %103, %104, %cst_46 {dimension_numbers = #tpu.dot_dimension_numbers<[1], [0], [0], [1], [0, 0, 1, 1], [], []>} : vector<8x32xf32>, vector<32x128xf32>, vector<8x128xf32> -> vector<8x128xf32>
    %c0_47 = arith.constant 0 : index
    %c0_48 = arith.constant 0 : index
    %106 = vector.load %arg12[%c0_47, %c0_48] : memref<1x128xf32, #tpu.memory_space<vmem>>, vector<1x128xf32>
    %107 = vector.broadcast %106 : vector<1x128xf32> to vector<8x128xf32>
    %108 = arith.addf %105, %107 : vector<8x128xf32>
    %109 = arith.mulf %108, %108 : vector<8x128xf32>
    %110 = arith.mulf %108, %109 : vector<8x128xf32>
    %cst_49 = arith.constant 4.471500e-02 : f32
    %111 = vector.broadcast %cst_49 : f32 to vector<8x128xf32>
    %112 = arith.mulf %111, %110 : vector<8x128xf32>
    %113 = arith.addf %108, %112 : vector<8x128xf32>
    %cst_50 = arith.constant 0.797884583 : f32
    %114 = vector.broadcast %cst_50 : f32 to vector<8x128xf32>
    %115 = arith.mulf %114, %113 : vector<8x128xf32>
    %116 = math.tanh %115 : vector<8x128xf32>
    %cst_51 = arith.constant 1.000000e+00 : f32
    %117 = vector.broadcast %cst_51 : f32 to vector<8x128xf32>
    %118 = arith.addf %117, %116 : vector<8x128xf32>
    %cst_52 = arith.constant 5.000000e-01 : f32
    %119 = vector.broadcast %cst_52 : f32 to vector<8x128xf32>
    %120 = arith.mulf %119, %118 : vector<8x128xf32>
    %121 = arith.mulf %108, %120 : vector<8x128xf32>
    %c0_53 = arith.constant 0 : index
    %c0_54 = arith.constant 0 : index
    %122 = vector.load %arg13[%c0_53, %c0_54] : memref<128x32xf32, #tpu.memory_space<vmem>>, vector<128x32xf32>
    %cst_55 = arith.constant dense<0.000000e+00> : vector<8x32xf32>
    %123 = tpu.matmul %121, %122, %cst_55 {dimension_numbers = #tpu.dot_dimension_numbers<[1], [0], [0], [1], [0, 0, 1, 1], [], []>} : vector<8x128xf32>, vector<128x32xf32>, vector<8x32xf32> -> vector<8x32xf32>
    %c0_56 = arith.constant 0 : index
    %c0_57 = arith.constant 0 : index
    %124 = vector.load %arg14[%c0_56, %c0_57] : memref<1x32xf32, #tpu.memory_space<vmem>>, vector<1x32xf32>
    %125 = vector.broadcast %124 : vector<1x32xf32> to vector<8x32xf32>
    %126 = arith.addf %123, %125 : vector<8x32xf32>
    %127 = arith.addf %79, %126 : vector<8x32xf32>
    %c0_58 = arith.constant 0 : index
    %c0_59 = arith.constant 0 : index
    %c0_60 = arith.constant 0 : index
    %128 = vector.load %arg15[%c0_58, %c0_59, %c0_60] : memref<1x8x32xf32, #tpu.memory_space<vmem>>, vector<1x8x32xf32>
    %129 = vector.shape_cast %128 : vector<1x8x32xf32> to vector<8x32xf32>
    %130 = vector.shape_cast %127 : vector<8x32xf32> to vector<1x8x32xf32>
    tpu.vector_store %arg15[%c0_58, %c0_59, %c0_60], %130 {strides = array<i32>} : memref<1x8x32xf32, #tpu.memory_space<vmem>>, vector<1x8x32xf32>,
    return
  }
  func.func @transform_0(%arg0: i32) -> (i32, i32, i32) {
    %c0_i32 = arith.constant 0 : i32
    %c0_i32_0 = arith.constant 0 : i32
    %c0_i32_1 = arith.constant 0 : i32
    return %arg0, %c0_i32, %c0_i32_0 : i32, i32, i32
  }
  func.func @transform_1(%arg0: i32) -> (i32, i32) {
    %c0_i32 = arith.constant 0 : i32
    %c0_i32_0 = arith.constant 0 : i32
    %c0_i32_1 = arith.constant 0 : i32
    return %c0_i32, %c0_i32_0 : i32, i32
  }
  func.func @transform_2(%arg0: i32) -> (i32, i32) {
    %c0_i32 = arith.constant 0 : i32
    %c0_i32_0 = arith.constant 0 : i32
    %c0_i32_1 = arith.constant 0 : i32
    return %c0_i32, %c0_i32_0 : i32, i32
  }
  func.func @transform_3(%arg0: i32) -> (i32, i32) {
    %c0_i32 = arith.constant 0 : i32
    %c0_i32_0 = arith.constant 0 : i32
    %c0_i32_1 = arith.constant 0 : i32
    return %c0_i32, %c0_i32_0 : i32, i32
  }
  func.func @transform_4(%arg0: i32) -> (i32, i32) {
    %c0_i32 = arith.constant 0 : i32
    %c0_i32_0 = arith.constant 0 : i32
    %c0_i32_1 = arith.constant 0 : i32
    return %c0_i32, %c0_i32_0 : i32, i32
  }
  func.func @transform_5(%arg0: i32) -> (i32, i32) {
    %c0_i32 = arith.constant 0 : i32
    %c0_i32_0 = arith.constant 0 : i32
    %c0_i32_1 = arith.constant 0 : i32
    return %c0_i32, %c0_i32_0 : i32, i32
  }
  func.func @transform_6(%arg0: i32) -> (i32, i32) {
    %c0_i32 = arith.constant 0 : i32
    %c0_i32_0 = arith.constant 0 : i32
    %c0_i32_1 = arith.constant 0 : i32
    return %c0_i32, %c0_i32_0 : i32, i32
  }
  func.func @transform_7(%arg0: i32) -> (i32, i32) {
    %c0_i32 = arith.constant 0 : i32
    %c0_i32_0 = arith.constant 0 : i32
    %c0_i32_1 = arith.constant 0 : i32
    return %c0_i32, %c0_i32_0 : i32, i32
  }
  func.func @transform_8(%arg0: i32) -> (i32, i32) {
    %c0_i32 = arith.constant 0 : i32
    %c0_i32_0 = arith.constant 0 : i32
    %c0_i32_1 = arith.constant 0 : i32
    return %c0_i32, %c0_i32_0 : i32, i32
  }
  func.func @transform_9(%arg0: i32) -> (i32, i32) {
    %c0_i32 = arith.constant 0 : i32
    %c0_i32_0 = arith.constant 0 : i32
    %c0_i32_1 = arith.constant 0 : i32
    return %c0_i32, %c0_i32_0 : i32, i32
  }
  func.func @transform_10(%arg0: i32) -> (i32, i32) {
    %c0_i32 = arith.constant 0 : i32
    %c0_i32_0 = arith.constant 0 : i32
    %c0_i32_1 = arith.constant 0 : i32
    return %c0_i32, %c0_i32_0 : i32, i32
  }
  func.func @transform_11(%arg0: i32) -> (i32, i32) {
    %c0_i32 = arith.constant 0 : i32
    %c0_i32_0 = arith.constant 0 : i32
    %c0_i32_1 = arith.constant 0 : i32
    return %c0_i32, %c0_i32_0 : i32, i32
  }
  func.func @transform_12(%arg0: i32) -> (i32, i32) {
    %c0_i32 = arith.constant 0 : i32
    %c0_i32_0 = arith.constant 0 : i32
    %c0_i32_1 = arith.constant 0 : i32
    return %c0_i32, %c0_i32_0 : i32, i32
  }
  func.func @transform_13(%arg0: i32) -> (i32, i32) {
    %c0_i32 = arith.constant 0 : i32
    %c0_i32_0 = arith.constant 0 : i32
    %c0_i32_1 = arith.constant 0 : i32
    return %c0_i32, %c0_i32_0 : i32, i32
  }
  func.func @transform_14(%arg0: i32) -> (i32, i32, i32) {
    %c0_i32 = arith.constant 0 : i32
    %c0_i32_0 = arith.constant 0 : i32
    %c0_i32_1 = arith.constant 0 : i32
    return %arg0, %c0_i32, %c0_i32_0 : i32, i32, i32
  }
}

</mosaic_0001>

<llo_original>
// kernel: tpu_custom_call.1
$region0: #{tpu_custom_call.1}
  #allocation0 [shape = 'u32[]', space=smem, size = 0x4, offset = 0x4, fixed_abs, tag = 'smem constant byte address 0x4 - core index']
  #allocation1 [shape = 'u32[72,128]{1,0:T(1,128)}', space=vmem, size = 0x9000, scoped, tag = 'internal scratch']
  %s0 = inlined_call_operand.vmem [shape: f32[8,8,32], index: 0, kind: input, shape index: {}]
  %s1 = inlined_call_operand.hbm [shape: f32[8,8], index: 1, kind: input, shape index: {}]
  %s2 = inlined_call_operand.vmem [shape: f32[1,32], index: 2, kind: input, shape index: {}]
  %s3 = inlined_call_operand.hbm [shape: f32[1,32], index: 3, kind: input, shape index: {}]
  %s4 = inlined_call_operand.vmem [shape: f32[32,96], index: 4, kind: input, shape index: {}]
  %s5 = inlined_call_operand.vmem [shape: f32[1,96], index: 5, kind: input, shape index: {}]
  %s6 = inlined_call_operand.vmem [shape: f32[32,32], index: 6, kind: input, shape index: {}]
  %s7 = inlined_call_operand.vmem [shape: f32[1,32], index: 7, kind: input, shape index: {}]
  %s8 = inlined_call_operand.vmem [shape: f32[1,32], index: 8, kind: input, shape index: {}]
  %s9 = inlined_call_operand.vmem [shape: f32[1,32], index: 9, kind: input, shape index: {}]
  %s10 = inlined_call_operand.vmem [shape: f32[32,128], index: 10, kind: input, shape index: {}]
  %s11 = inlined_call_operand.vmem [shape: f32[1,128], index: 11, kind: input, shape index: {}]
  %s12 = inlined_call_operand.vmem [shape: f32[128,32], index: 12, kind: input, shape index: {}]
  %s13 = inlined_call_operand.vmem [shape: f32[1,32], index: 13, kind: input, shape index: {}]
  %s14 = inlined_call_operand.hbm [shape: f32[8,8,32], index: 14, kind: output, shape index: {}]
  %s15 = sld [smem:[#allocation0]]
  $region97: #{tpu_custom_call.1} parent=0
    _
  %s17 = ssub.s32 1, %s15
  %s18 = scalar_select 0, %s17, %s15
  $region1: #{tpu_custom_call.1} parent=0
    #allocation2 [shape = 'u8[4096]{0}', space=vmem, size = 0x1000, scoped, tag = 'input window, operand 1, single buffered']
    #allocation3 [shape = 's32[2]{0}', space=sflag, size = 0x8, scoped, tag = 'scoped memory for tpu_custom_call.1']
    #allocation4 [shape = 's32[2]{0}', space=sflag, size = 0x8, scoped, tag = 'scoped memory for tpu_custom_call.1']
    #allocation5 [shape = 'u8[512]{0}', space=vmem, size = 0x400, scoped, tag = 'input window, operand 3, single buffered']
    #allocation6 [shape = 's32[1]{0}', space=sflag, size = 0x4, scoped, tag = 'scoped memory for tpu_custom_call.1']
    #allocation7 [shape = 'u8[8192]{0}', space=vmem, size = 0x2000, scoped, tag = 'output window, operand 0']
    %19 = vsyncpa [#allocation3], 0
    %20 = vsyncpa [#allocation6], 0
    %21 = vsyncpa [#allocation4], 0
    %s22 = scalar_lea.sflag [#allocation4], 1
    %23 = vsyncpa %s22, 0
    loop: start=0, step=1, limit=10
    $region2: #{tpu_custom_call.1} parent=1 // loop_pre_header
      _
    $region3: #{tpu_custom_call.1} parent=1 // loop_header
      %s25 = sphi 0, %s29
      %p26 = scmp.ge.s32.totalorder %s25, 10
      %s35 = sphi 0, %s37
      %s38 = sphi 0, %s35
      %s39 = sphi 0, %s38
      %s55 = sphi 0, %s39
      %s59 = sphi 0, %s59
      %s61 = sphi 0, %s59
      %s62 = sphi 0, %s61
      %s76 = sphi 0, %s62
      %s80 = sphi 0, %s80
      %s82 = sphi 0, %s80
      %s83 = sphi 0, %s82
      %s97 = sphi 0, %s83
      %s101 = sphi 0, %s101
      %s103 = sphi 0, %s101
      %s104 = sphi 0, %s103
      %s118 = sphi 0, %s104
      %s122 = sphi 0, %s122
      %s124 = sphi 0, %s122
      %s125 = sphi 0, %s124
      %s139 = sphi 0, %s125
      %s143 = sphi 0, %s143
      %s145 = sphi 0, %s143
      %s146 = sphi 0, %s145
      %s160 = sphi 0, %s146
      %s164 = sphi 0, %s164
      %s166 = sphi 0, %s164
      %s167 = sphi 0, %s166
      %s181 = sphi 0, %s167
      %s185 = sphi 0, %s185
      %s187 = sphi 0, %s185
      %s188 = sphi 0, %s187
      %s202 = sphi 0, %s188
      %s206 = sphi 0, %s206
      %s208 = sphi 0, %s206
      %s209 = sphi 0, %s208
      %s223 = sphi 0, %s209
      %s227 = sphi 0, %s227
      %s229 = sphi 0, %s227
      %s230 = sphi 0, %s229
      %s244 = sphi 0, %s230
      %s248 = sphi 0, %s248
      %s250 = sphi 0, %s248
      %s251 = sphi 0, %s250
      %s265 = sphi 0, %s251
      %s269 = sphi 0, %s269
      %s271 = sphi 0, %s269
      %s272 = sphi 0, %s271
      %s286 = sphi 0, %s272
      %s290 = sphi 0, %s290
      %s292 = sphi 0, %s290
      %s293 = sphi 0, %s292
      %s307 = sphi 0, %s293
      %s311 = sphi 0, %s311
      %s313 = sphi 0, %s311
      %s314 = sphi 0, %s313
      %s328 = sphi 0, %s314
      %s334 = sphi 0, %s336
      %s337 = sphi 0, %s334
      %s338 = sphi 0, %s337
      %s354 = sphi 0, %s338
    $region4: #{tpu_custom_call.1} parent=1 // loop_header_branch
      %28 = sbr.rel (%p26) target = $region8
    $region5: #{tpu_custom_call.1} parent=1 // loop_body
      %s30 = ssub.s32 %s25, 1
      %s31 = ssub.s32 %s25, 2
      %s32 = sadd.s32 %s25, 1
      %s33 = ssub.s32 %s25, %s32
      %p34 = scmp.eq.s32.totalorder %s33, 0
      %s36 = sadd.s32 %s35, 1
      %s37 = scalar_select %p34, %s35, %s36
      %p40 = pneg %p34
      %p41 = scmp.eq.s32.totalorder %s25, 7
      %p42 = por %p40, %p41
      %p43 = scmp.ne.s32.totalorder %s35, %s38
      %p44 = scmp.eq.s32.totalorder %s25, 0
      %p45 = por %p43, %p44
      %p46 = scmp.ne.s32.totalorder %s35, %s38
      %p47 = scmp.eq.s32.totalorder %s30, 7
      %p48 = por %p46, %p47
      %p49 = scmp.ne.s32.totalorder %s38, %s39
      %p50 = scmp.eq.s32.totalorder %s30, 0
      %p51 = por %p49, %p50
      %p52 = scmp.ne.s32.totalorder %s38, %s39
      %p53 = scmp.eq.s32.totalorder %s31, 7
      %p54 = por %p52, %p53
      %p56 = scmp.ne.s32.totalorder %s39, %s55
      %p57 = scmp.eq.s32.totalorder %s31, 0
      %p58 = por %p56, %p57
      %s60 = sadd.s32 %s59, 1
      %p63 = scmp.eq.s32.totalorder %s25, 7
      %p64 = scmp.ne.s32.totalorder %s59, %s61
      %p65 = scmp.eq.s32.totalorder %s25, 0
      %p66 = por %p64, %p65
      %p67 = scmp.ne.s32.totalorder %s59, %s61
      %p68 = scmp.eq.s32.totalorder %s30, 7
      %p69 = por %p67, %p68
      %p70 = scmp.ne.s32.totalorder %s61, %s62
      %p71 = scmp.eq.s32.totalorder %s30, 0
      %p72 = por %p70, %p71
      %p73 = scmp.ne.s32.totalorder %s61, %s62
      %p74 = scmp.eq.s32.totalorder %s31, 7
      %p75 = por %p73, %p74
      %p77 = scmp.ne.s32.totalorder %s62, %s76
      %p78 = scmp.eq.s32.totalorder %s31, 0
      %p79 = por %p77, %p78
      %s81 = sadd.s32 %s80, 1
      %p84 = scmp.eq.s32.totalorder %s25, 7
      %p85 = scmp.ne.s32.totalorder %s80, %s82
      %p86 = scmp.eq.s32.totalorder %s25, 0
      %p87 = por %p85, %p86
      %p88 = scmp.ne.s32.totalorder %s80, %s82
      %p89 = scmp.eq.s32.totalorder %s30, 7
      %p90 = por %p88, %p89
      %p91 = scmp.ne.s32.totalorder %s82, %s83
      %p92 = scmp.eq.s32.totalorder %s30, 0
      %p93 = por %p91, %p92
      %p94 = scmp.ne.s32.totalorder %s82, %s83
      %p95 = scmp.eq.s32.totalorder %s31, 7
      %p96 = por %p94, %p95
      %p98 = scmp.ne.s32.totalorder %s83, %s97
      %p99 = scmp.eq.s32.totalorder %s31, 0
      %p100 = por %p98, %p99
      %s102 = sadd.s32 %s101, 1
      %p105 = scmp.eq.s32.totalorder %s25, 7
      %p106 = scmp.ne.s32.totalorder %s101, %s103
      %p107 = scmp.eq.s32.totalorder %s25, 0
      %p108 = por %p106, %p107
      %p109 = scmp.ne.s32.totalorder %s101, %s103
      %p110 = scmp.eq.s32.totalorder %s30, 7
      %p111 = por %p109, %p110
      %p112 = scmp.ne.s32.totalorder %s103, %s104
      %p113 = scmp.eq.s32.totalorder %s30, 0
      %p114 = por %p112, %p113
      %p115 = scmp.ne.s32.totalorder %s103, %s104
      %p116 = scmp.eq.s32.totalorder %s31, 7
      %p117 = por %p115, %p116
      %p119 = scmp.ne.s32.totalorder %s104, %s118
      %p120 = scmp.eq.s32.totalorder %s31, 0
      %p121 = por %p119, %p120
      %s123 = sadd.s32 %s122, 1
      %p126 = scmp.eq.s32.totalorder %s25, 7
      %p127 = scmp.ne.s32.totalorder %s122, %s124
      %p128 = scmp.eq.s32.totalorder %s25, 0
      %p129 = por %p127, %p128
      %p130 = scmp.ne.s32.totalorder %s122, %s124
      %p131 = scmp.eq.s32.totalorder %s30, 7
      %p132 = por %p130, %p131
      %p133 = scmp.ne.s32.totalorder %s124, %s125
      %p134 = scmp.eq.s32.totalorder %s30, 0
      %p135 = por %p133, %p134
      %p136 = scmp.ne.s32.totalorder %s124, %s125
      %p137 = scmp.eq.s32.totalorder %s31, 7
      %p138 = por %p136, %p137
      %p140 = scmp.ne.s32.totalorder %s125, %s139
      %p141 = scmp.eq.s32.totalorder %s31, 0
      %p142 = por %p140, %p141
      %s144 = sadd.s32 %s143, 1
      %p147 = scmp.eq.s32.totalorder %s25, 7
      %p148 = scmp.ne.s32.totalorder %s143, %s145
      %p149 = scmp.eq.s32.totalorder %s25, 0
      %p150 = por %p148, %p149
      %p151 = scmp.ne.s32.totalorder %s143, %s145
      %p152 = scmp.eq.s32.totalorder %s30, 7
      %p153 = por %p151, %p152
      %p154 = scmp.ne.s32.totalorder %s145, %s146
      %p155 = scmp.eq.s32.totalorder %s30, 0
      %p156 = por %p154, %p155
      %p157 = scmp.ne.s32.totalorder %s145, %s146
      %p158 = scmp.eq.s32.totalorder %s31, 7
      %p159 = por %p157, %p158
      %p161 = scmp.ne.s32.totalorder %s146, %s160
      %p162 = scmp.eq.s32.totalorder %s31, 0
      %p163 = por %p161, %p162
      %s165 = sadd.s32 %s164, 1
      %p168 = scmp.eq.s32.totalorder %s25, 7
      %p169 = scmp.ne.s32.totalorder %s164, %s166
      %p170 = scmp.eq.s32.totalorder %s25, 0
      %p171 = por %p169, %p170
      %p172 = scmp.ne.s32.totalorder %s164, %s166
      %p173 = scmp.eq.s32.totalorder %s30, 7
      %p174 = por %p172, %p173
      %p175 = scmp.ne.s32.totalorder %s166, %s167
      %p176 = scmp.eq.s32.totalorder %s30, 0
      %p177 = por %p175, %p176
      %p178 = scmp.ne.s32.totalorder %s166, %s167
      %p179 = scmp.eq.s32.totalorder %s31, 7
      %p180 = por %p178, %p179
      %p182 = scmp.ne.s32.totalorder %s167, %s181
      %p183 = scmp.eq.s32.totalorder %s31, 0
      %p184 = por %p182, %p183
      %s186 = sadd.s32 %s185, 1
      %p189 = scmp.eq.s32.totalorder %s25, 7
      %p190 = scmp.ne.s32.totalorder %s185, %s187
      %p191 = scmp.eq.s32.totalorder %s25, 0
      %p192 = por %p190, %p191
      %p193 = scmp.ne.s32.totalorder %s185, %s187
      %p194 = scmp.eq.s32.totalorder %s30, 7
      %p195 = por %p193, %p194
      %p196 = scmp.ne.s32.totalorder %s187, %s188
      %p197 = scmp.eq.s32.totalorder %s30, 0
      %p198 = por %p196, %p197
      %p199 = scmp.ne.s32.totalorder %s187, %s188
      %p200 = scmp.eq.s32.totalorder %s31, 7
      %p201 = por %p199, %p200
      %p203 = scmp.ne.s32.totalorder %s188, %s202
      %p204 = scmp.eq.s32.totalorder %s31, 0
      %p205 = por %p203, %p204
      %s207 = sadd.s32 %s206, 1
      %p210 = scmp.eq.s32.totalorder %s25, 7
      %p211 = scmp.ne.s32.totalorder %s206, %s208
      %p212 = scmp.eq.s32.totalorder %s25, 0
      %p213 = por %p211, %p212
      %p214 = scmp.ne.s32.totalorder %s206, %s208
      %p215 = scmp.eq.s32.totalorder %s30, 7
      %p216 = por %p214, %p215
      %p217 = scmp.ne.s32.totalorder %s208, %s209
      %p218 = scmp.eq.s32.totalorder %s30, 0
      %p219 = por %p217, %p218
      %p220 = scmp.ne.s32.totalorder %s208, %s209
      %p221 = scmp.eq.s32.totalorder %s31, 7
      %p222 = por %p220, %p221
      %p224 = scmp.ne.s32.totalorder %s209, %s223
      %p225 = scmp.eq.s32.totalorder %s31, 0
      %p226 = por %p224, %p225
      %s228 = sadd.s32 %s227, 1
      %p231 = scmp.eq.s32.totalorder %s25, 7
      %p232 = scmp.ne.s32.totalorder %s227, %s229
      %p233 = scmp.eq.s32.totalorder %s25, 0
      %p234 = por %p232, %p233
      %p235 = scmp.ne.s32.totalorder %s227, %s229
      %p236 = scmp.eq.s32.totalorder %s30, 7
      %p237 = por %p235, %p236
      %p238 = scmp.ne.s32.totalorder %s229, %s230
      %p239 = scmp.eq.s32.totalorder %s30, 0
      %p240 = por %p238, %p239
      %p241 = scmp.ne.s32.totalorder %s229, %s230
      %p242 = scmp.eq.s32.totalorder %s31, 7
      %p243 = por %p241, %p242
      %p245 = scmp.ne.s32.totalorder %s230, %s244
      %p246 = scmp.eq.s32.totalorder %s31, 0
      %p247 = por %p245, %p246
      %s249 = sadd.s32 %s248, 1
      %p252 = scmp.eq.s32.totalorder %s25, 7
      %p253 = scmp.ne.s32.totalorder %s248, %s250
      %p254 = scmp.eq.s32.totalorder %s25, 0
      %p255 = por %p253, %p254
      %p256 = scmp.ne.s32.totalorder %s248, %s250
      %p257 = scmp.eq.s32.totalorder %s30, 7
      %p258 = por %p256, %p257
      %p259 = scmp.ne.s32.totalorder %s250, %s251
      %p260 = scmp.eq.s32.totalorder %s30, 0
      %p261 = por %p259, %p260
      %p262 = scmp.ne.s32.totalorder %s250, %s251
      %p263 = scmp.eq.s32.totalorder %s31, 7
      %p264 = por %p262, %p263
      %p266 = scmp.ne.s32.totalorder %s251, %s265
      %p267 = scmp.eq.s32.totalorder %s31, 0
      %p268 = por %p266, %p267
      %s270 = sadd.s32 %s269, 1
      %p273 = scmp.eq.s32.totalorder %s25, 7
      %p274 = scmp.ne.s32.totalorder %s269, %s271
      %p275 = scmp.eq.s32.totalorder %s25, 0
      %p276 = por %p274, %p275
      %p277 = scmp.ne.s32.totalorder %s269, %s271
      %p278 = scmp.eq.s32.totalorder %s30, 7
      %p279 = por %p277, %p278
      %p280 = scmp.ne.s32.totalorder %s271, %s272
      %p281 = scmp.eq.s32.totalorder %s30, 0
      %p282 = por %p280, %p281
      %p283 = scmp.ne.s32.totalorder %s271, %s272
      %p284 = scmp.eq.s32.totalorder %s31, 7
      %p285 = por %p283, %p284
      %p287 = scmp.ne.s32.totalorder %s272, %s286
      %p288 = scmp.eq.s32.totalorder %s31, 0
      %p289 = por %p287, %p288
      %s291 = sadd.s32 %s290, 1
      %p294 = scmp.eq.s32.totalorder %s25, 7
      %p295 = scmp.ne.s32.totalorder %s290, %s292
      %p296 = scmp.eq.s32.totalorder %s25, 0
      %p297 = por %p295, %p296
      %p298 = scmp.ne.s32.totalorder %s290, %s292
      %p299 = scmp.eq.s32.totalorder %s30, 7
      %p300 = por %p298, %p299
      %p301 = scmp.ne.s32.totalorder %s292, %s293
      %p302 = scmp.eq.s32.totalorder %s30, 0
      %p303 = por %p301, %p302
      %p304 = scmp.ne.s32.totalorder %s292, %s293
      %p305 = scmp.eq.s32.totalorder %s31, 7
      %p306 = por %p304, %p305
      %p308 = scmp.ne.s32.totalorder %s293, %s307
      %p309 = scmp.eq.s32.totalorder %s31, 0
      %p310 = por %p308, %p309
      %s312 = sadd.s32 %s311, 1
      %p315 = scmp.eq.s32.totalorder %s25, 7
      %p316 = scmp.ne.s32.totalorder %s311, %s313
      %p317 = scmp.eq.s32.totalorder %s25, 0
      %p318 = por %p316, %p317
      %p319 = scmp.ne.s32.totalorder %s311, %s313
      %p320 = scmp.eq.s32.totalorder %s30, 7
      %p321 = por %p319, %p320
      %p322 = scmp.ne.s32.totalorder %s313, %s314
      %p323 = scmp.eq.s32.totalorder %s30, 0
      %p324 = por %p322, %p323
      %p325 = scmp.ne.s32.totalorder %s313, %s314
      %p326 = scmp.eq.s32.totalorder %s31, 7
      %p327 = por %p325, %p326
      %p329 = scmp.ne.s32.totalorder %s314, %s328
      %p330 = scmp.eq.s32.totalorder %s31, 0
      %p331 = por %p329, %p330
      %s332 = ssub.s32 %s25, %s32
      %p333 = scmp.eq.s32.totalorder %s332, 0
      %s335 = sadd.s32 %s334, 1
      %s336 = scalar_select %p333, %s334, %s335
      %p339 = pneg %p333
      %p340 = scmp.eq.s32.totalorder %s25, 7
      %p341 = por %p339, %p340
      %p342 = scmp.ne.s32.totalorder %s334, %s337
      %p343 = scmp.eq.s32.totalorder %s25, 0
      %p344 = por %p342, %p343
      %p345 = scmp.ne.s32.totalorder %s334, %s337
      %p346 = scmp.eq.s32.totalorder %s30, 7
      %p347 = por %p345, %p346
      %p348 = scmp.ne.s32.totalorder %s337, %s338
      %p349 = scmp.eq.s32.totalorder %s30, 0
      %p350 = por %p348, %p349
      %p351 = scmp.ne.s32.totalorder %s337, %s338
      %p352 = scmp.eq.s32.totalorder %s31, 7
      %p353 = por %p351, %p352
      %p355 = scmp.ne.s32.totalorder %s338, %s354
      %p356 = scmp.eq.s32.totalorder %s31, 0
      %p357 = por %p355, %p356
      %p358 = scmp.le.s32.totalorder 1, %s25
      %p359 = scmp.lt.s32.totalorder %s25, 9
      %p360 = pnand %p358, %p359
      %p361 = pneg %p360
      // Predicated region
      $region9: #{tpu_custom_call.1} parent=5 // pred_check
        _
      $region10: #{tpu_custom_call.1} parent=5 // pred_check_branch
        %363 = sbr.rel (%p360) target = $region12
      $region11: #{tpu_custom_call.1} parent=5 // pred_region
        %s364 = ssub.s32 %s25, 1
        // Predicated region
        $region13: #{tpu_custom_call.1} parent=11 // pred_check
          %p365 = pneg %p72
        $region14: #{tpu_custom_call.1} parent=11 // pred_check_branch
          %367 = sbr.rel (%p365) target = $region16
        $region15: #{tpu_custom_call.1} parent=11 // pred_region
          %369 = vsyncadd [#allocation3], 0
          %s371 = sshll.u32 %s1, 4
          %s372 = int_to_ptr.hbm [resolvable:$true] %s371
          %s373 = sshll.u32 [#allocation2], 4
          %s374 = int_to_ptr.vmem [resolvable:$true] %s373
          %376 = dma.hbm_to_vmem [thread:$0]  %s372, 128, %s374, [#allocation3]
        $region16: #{tpu_custom_call.1} parent=11 // pred_fallthru
          _
        // Predicated region
        $region17: #{tpu_custom_call.1} parent=11 // pred_check
          %p377 = pneg %p93
        $region18: #{tpu_custom_call.1} parent=11 // pred_check_branch
          %379 = sbr.rel (%p377) target = $region20
        $region19: #{tpu_custom_call.1} parent=11 // pred_region
          _
        $region20: #{tpu_custom_call.1} parent=11 // pred_fallthru
          _
        // Predicated region
        $region21: #{tpu_custom_call.1} parent=11 // pred_check
          %p380 = pneg %p114
        $region22: #{tpu_custom_call.1} parent=11 // pred_check_branch
          %382 = sbr.rel (%p380) target = $region24
        $region23: #{tpu_custom_call.1} parent=11 // pred_region
          %384 = vsyncadd [#allocation6], 0
          %s386 = sshll.u32 %s3, 4
          %s387 = int_to_ptr.hbm [resolvable:$true] %s386
          %s388 = sshll.u32 [#allocation5], 4
          %s389 = int_to_ptr.vmem [resolvable:$true] %s388
          %391 = dma.hbm_to_vmem [thread:$0]  %s387, 16, %s389, [#allocation6]
        $region24: #{tpu_custom_call.1} parent=11 // pred_fallthru
          _
        // Predicated region
        $region25: #{tpu_custom_call.1} parent=11 // pred_check
          %p392 = pneg %p135
        $region26: #{tpu_custom_call.1} parent=11 // pred_check_branch
          %394 = sbr.rel (%p392) target = $region28
        $region27: #{tpu_custom_call.1} parent=11 // pred_region
          _
        $region28: #{tpu_custom_call.1} parent=11 // pred_fallthru
          _
        // Predicated region
        $region29: #{tpu_custom_call.1} parent=11 // pred_check
          %p395 = pneg %p156
        $region30: #{tpu_custom_call.1} parent=11 // pred_check_branch
          %397 = sbr.rel (%p395) target = $region32
        $region31: #{tpu_custom_call.1} parent=11 // pred_region
          _
        $region32: #{tpu_custom_call.1} parent=11 // pred_fallthru
          _
        // Predicated region
        $region33: #{tpu_custom_call.1} parent=11 // pred_check
          %p398 = pneg %p177
        $region34: #{tpu_custom_call.1} parent=11 // pred_check_branch
          %400 = sbr.rel (%p398) target = $region36
        $region35: #{tpu_custom_call.1} parent=11 // pred_region
          _
        $region36: #{tpu_custom_call.1} parent=11 // pred_fallthru
          _
        // Predicated region
        $region37: #{tpu_custom_call.1} parent=11 // pred_check
          %p401 = pneg %p198
        $region38: #{tpu_custom_call.1} parent=11 // pred_check_branch
          %403 = sbr.rel (%p401) target = $region40
        $region39: #{tpu_custom_call.1} parent=11 // pred_region
          _
        $region40: #{tpu_custom_call.1} parent=11 // pred_fallthru
          _
        // Predicated region
        $region41: #{tpu_custom_call.1} parent=11 // pred_check
          %p404 = pneg %p219
        $region42: #{tpu_custom_call.1} parent=11 // pred_check_branch
          %406 = sbr.rel (%p404) target = $region44
        $region43: #{tpu_custom_call.1} parent=11 // pred_region
          _
        $region44: #{tpu_custom_call.1} parent=11 // pred_fallthru
          _
        // Predicated region
        $region45: #{tpu_custom_call.1} parent=11 // pred_check
          %p407 = pneg %p240
        $region46: #{tpu_custom_call.1} parent=11 // pred_check_branch
          %409 = sbr.rel (%p407) target = $region48
        $region47: #{tpu_custom_call.1} parent=11 // pred_region
          _
        $region48: #{tpu_custom_call.1} parent=11 // pred_fallthru
          _
        // Predicated region
        $region49: #{tpu_custom_call.1} parent=11 // pred_check
          %p410 = pneg %p261
        $region50: #{tpu_custom_call.1} parent=11 // pred_check_branch
          %412 = sbr.rel (%p410) target = $region52
        $region51: #{tpu_custom_call.1} parent=11 // pred_region
          _
        $region52: #{tpu_custom_call.1} parent=11 // pred_fallthru
          _
        // Predicated region
        $region53: #{tpu_custom_call.1} parent=11 // pred_check
          %p413 = pneg %p282
        $region54: #{tpu_custom_call.1} parent=11 // pred_check_branch
          %415 = sbr.rel (%p413) target = $region56
        $region55: #{tpu_custom_call.1} parent=11 // pred_region
          _
        $region56: #{tpu_custom_call.1} parent=11 // pred_fallthru
          _
        // Predicated region
        $region57: #{tpu_custom_call.1} parent=11 // pred_check
          %p416 = pneg %p303
        $region58: #{tpu_custom_call.1} parent=11 // pred_check_branch
          %418 = sbr.rel (%p416) target = $region60
        $region59: #{tpu_custom_call.1} parent=11 // pred_region
          _
        $region60: #{tpu_custom_call.1} parent=11 // pred_fallthru
          _
        // Predicated region
        $region61: #{tpu_custom_call.1} parent=11 // pred_check
          %p419 = pneg %p324
        $region62: #{tpu_custom_call.1} parent=11 // pred_check_branch
          %421 = sbr.rel (%p419) target = $region64
        $region63: #{tpu_custom_call.1} parent=11 // pred_region
          _
        $region64: #{tpu_custom_call.1} parent=11 // pred_fallthru
          _
      $region12: #{tpu_custom_call.1} parent=5 // pred_fallthru
        _
      %p422 = scmp.lt.s32.totalorder %s25, 8
      // Predicated region
      $region65: #{tpu_custom_call.1} parent=5 // pred_check
        %p423 = pneg %p422
      $region66: #{tpu_custom_call.1} parent=5 // pred_check_branch
        %425 = sbr.rel (%p423) target = $region68
      $region67: #{tpu_custom_call.1} parent=5 // pred_region
        // Predicated region
        $region69: #{tpu_custom_call.1} parent=67 // pred_check
          %p426 = pneg %p45
        $region70: #{tpu_custom_call.1} parent=67 // pred_check_branch
          %428 = sbr.rel (%p426) target = $region72
        $region71: #{tpu_custom_call.1} parent=67 // pred_region
          %p429 = scmp.lt.s32.totalorder %s25, 7
          %s430 = scalar_select %p429, %s25, 7
          %s431 = smul.addr %s430, 8
          %s432 = scalar_lea.vmem %s0, %s431
        $region72: #{tpu_custom_call.1} parent=67 // pred_fallthru
          _
      $region68: #{tpu_custom_call.1} parent=5 // pred_fallthru
        _
      %p433 = scmp.le.s32.totalorder 1, %s25
      %p434 = scmp.lt.s32.totalorder %s25, 9
      %p435 = pnand %p433, %p434
      %p436 = pneg %p435
      // Predicated region
      $region73: #{tpu_custom_call.1} parent=5 // pred_check
        _
      $region74: #{tpu_custom_call.1} parent=5 // pred_check_branch
        %438 = sbr.rel (%p435) target = $region76
      $region75: #{tpu_custom_call.1} parent=5 // pred_region
        %s439 = ssub.s32 %s25, 1
        // Predicated region
        $region77: #{tpu_custom_call.1} parent=75 // pred_check
          %p440 = pneg %p72
        $region78: #{tpu_custom_call.1} parent=75 // pred_check_branch
          %442 = sbr.rel (%p440) target = $region80
        $region79: #{tpu_custom_call.1} parent=75 // pred_region
          %444 = dma.done [#allocation3], 128
        $region80: #{tpu_custom_call.1} parent=75 // pred_fallthru
          _
        // Predicated region
        $region81: #{tpu_custom_call.1} parent=75 // pred_check
          %p445 = pneg %p114
        $region82: #{tpu_custom_call.1} parent=75 // pred_check_branch
          %447 = sbr.rel (%p445) target = $region84
        $region83: #{tpu_custom_call.1} parent=75 // pred_region
          %449 = dma.done [#allocation6], 16
        $region84: #{tpu_custom_call.1} parent=75 // pred_fallthru
          _
        %p450 = scmp.lt.s32.totalorder %s30, 7
        %s451 = scalar_select %p450, %s30, 7
        %s452 = smul.addr %s451, 8
        %s453 = scalar_lea.vmem %s0, %s452
        %p454 = pneg %p51
        %p455 = pneg %p48
        %p456 = pneg %p72
        %p457 = pneg %p69
        %p458 = pneg %p93
        %p459 = pneg %p90
        %p460 = pneg %p114
        %p461 = pneg %p111
        %p462 = pneg %p135
        %p463 = pneg %p132
        %p464 = pneg %p156
        %p465 = pneg %p153
        %p466 = pneg %p177
        %p467 = pneg %p174
        %p468 = pneg %p198
        %p469 = pneg %p195
        %p470 = pneg %p219
        %p471 = pneg %p216
        %p472 = pneg %p240
        %p473 = pneg %p237
        %p474 = pneg %p261
        %p475 = pneg %p258
        %p476 = pneg %p282
        %p477 = pneg %p279
        %p478 = pneg %p303
        %p479 = pneg %p300
        %p480 = pneg %p324
        %p481 = pneg %p321
        %p482 = pneg %p350
        %p483 = pneg %p347
        %s484 = sand.u32 %s337, 1
        %s485 = scalar_lea.sflag [#allocation4], %s484
        %s486 = sand.u32 %s337, 1
        %s487 = smul.addr %s486, 8
        %s488 = scalar_lea.vmem [#allocation7], %s487
        %p489 = scmp.lt.s32.totalorder %s30, 7
        %s490 = scalar_select %p489, %s30, 7
        %s491 = smul.addr %s490, 8
        %s492 = scalar_lea.vmem %s0, %s491
        %v493 = vld [vmem:[%s492] sm:$0xff]
        %v494 = vld [vmem:[%s2] sm:$0x1]
        %v495 = vld [vmem:[#allocation5] sm:$0x1]
        %vm496 = vcmask 261120
        %v497 = vsel %vm496, %v493, 0.0
        %498 = vadd.xlane.f32.xlu0 %v497
        %v499 = vpop.xlane.xlu0 %498
        %v500 = vrcp.pop 32.0
        %v501 = vmul.f32 32.0, %v500
        %v502 = vsub.f32 1.0, %v501
        %v503 = vmul.f32 %v500, %v502
        %v504 = vadd.f32 %v500, %v503
        %vm505 = vweird.f32 %v500
        %v506 = vsel %vm505, %v500, %v504
        %v507 = vmul.f32 %v499, %v506
        %v508 = vsub.f32 %v493, %v507
        %v509 = vmul.f32 %v508, %v508
        %v510 = vsel %vm496, %v509, 0.0
        %511 = vadd.xlane.f32.xlu0 %v510
        %v512 = vpop.xlane.xlu0 %511
        %v513 = vmul.f32 %v512, %v506
        %v514 = vadd.f32 %v513, 1e-05
        %v515 = vrsqrt.pop %v514
        %v516 = vmul.f32 %v515, %v514
        %v517 = vmul.f32 %v516, %v515
        %v518 = vmul.f32 0.5, %v517
        %v519 = vsub.f32 1.5, %v518
        %v520 = vmul.f32 %v515, %v519
        %vm521 = vweird.f32 %v514
        %vm522 = vweird.f32 %v515
        %vm523 = vmor %vm521, %vm522
        %v524 = vsel %vm523, %v515, %v520
        %v525 = vmul.f32 %v508, %v524
        %v527 = vperm.slane %v494, 0
        %v529 = vmul.f32 %v525, %v527
        %v531 = vperm.slane %v495, 0
        %v533 = vadd.f32 %v529, %v531
        %v534 = vld [vmem:[%s4] sm:$0xff]
        %v535 = vld [vmem:[%s4 + $0x8] sm:$0xff]
        %v536 = vld [vmem:[%s4 + $0x10] sm:$0xff]
        %v537 = vld [vmem:[%s4 + $0x18] sm:$0xff]
        %v538 = vld [vmem:[%s5] sm:$0x1]
        %v540 = vperm.slane %v538, 0
        %v543 = vsel %vm496, %v533, 0
        %545 = vmatpush.msra.mxu0 0.0
        %546 = vmatpush.msra.mxu0 0.0
        %547 = vmatpush.msra.mxu0 0.0
        %548 = vmatpush.msra.mxu0 0.0
        %549 = vmatpush.msra.mxu0 0.0
        %550 = vmatpush.msra.mxu0 0.0
        %551 = vmatpush.msra.mxu0 0.0
        %552 = vmatpush.msra.mxu0 0.0
        %553 = vmatpush.msra.mxu0 0.0
        %554 = vmatpush.msra.mxu0 0.0
        %555 = vmatpush.msra.mxu0 0.0
        %556 = vmatpush.msra.mxu0 0.0
        %557 = vmatpush.msra.mxu0 %v537
        %558 = vmatpush.msra.mxu0 %v536
        %559 = vmatpush.msra.mxu0 %v535
        %560 = vmatpush.msra.mxu0 %v534
        %561 = vmatmul.f32.gmra.mxu0 %v543
        %v562 = vpop.f32.mrf.mxu0
        %v563 = vadd.f32 %v540, %v562
        %564 = vdwg.mxu0
        %v565 = vld [vmem:[#allocation2] sm:$0xff]
        %567 = vrot.lane.b32.xlu0 %v563, 96
        %v568 = vpop.permute.xlu0 %567
        %vm569 = vcmask 130048
        %v570 = vsel %vm569, %v563, 0
        %v572 = vsel %vm569, %v568, 0
        %574 = vmatpush.xpose.msra.mxu0 0.0
        %575 = vmatpush.xpose.msra.mxu0 0.0
        %576 = vmatpush.xpose.msra.mxu0 0.0
        %577 = vmatpush.xpose.msra.mxu0 0.0
        %578 = vmatpush.xpose.msra.mxu0 0.0
        %579 = vmatpush.xpose.msra.mxu0 0.0
        %580 = vmatpush.xpose.msra.mxu0 0.0
        %581 = vmatpush.xpose.msra.mxu0 0.0
        %582 = vmatpush.xpose.msra.mxu0 0.0
        %583 = vmatpush.xpose.msra.mxu0 0.0
        %584 = vmatpush.xpose.msra.mxu0 0.0
        %585 = vmatpush.xpose.msra.mxu0 0.0
        %586 = vmatpush.xpose.msra.mxu0 0.0
        %587 = vmatpush.xpose.msra.mxu0 0.0
        %588 = vmatpush.xpose.msra.mxu0 0.0
        %589 = vmatpush.xpose.msra.mxu0 %v572
        %590 = vmatmul.f32.gmra.mxu0 %v570
        %v591 = vpop.f32.mrf.mxu0
        %v592 = vadd.f32 0.0, %v591
        %593 = vdwg.mxu0
        %v594 = vmul.f32 %v592, 0.25
        %v595 = vadd.f32 %v594, %v565
        %vm596 = vcmask 64512
        %v597 = vsel %vm596, %v595, -inf
        %598 = vmax.xlane.f32.xlu0 %v597
        %v599 = vpop.xlane.xlu0 %598
        %v600 = vsub.f32 %v595, %v599
        %v601 = vmul.f32 %v600, 1.442695
        %v602 = vpow.pop %v601
        %v603 = vsel %vm596, %v602, 0.0
        %604 = vadd.xlane.f32.xlu0 %v603
        %v605 = vpop.xlane.xlu0 %604
        %v606 = vrcp.pop %v605
        %v607 = vmul.f32 %v605, %v606
        %v608 = vsub.f32 1.0, %v607
        %v609 = vmul.f32 %v606, %v608
        %v610 = vadd.f32 %v606, %v609
        %vm611 = vweird.f32 %v605
        %vm612 = vweird.f32 %v606
        %vm613 = vmor %vm611, %vm612
        %v614 = vsel %vm613, %v606, %v610
        %v615 = vand.u32 2147483647, %v605
        %vm616 = vcmp.eq.f32.partialorder %v615, 8.507059e+37
        %v617 = vand.u32 %v605, 2147483648
        %v618 = vor.u32 1.1754944e-38, %v617
        %v619 = vsel %vm616, %v618, %v614
        %v620 = vmul.f32 %v602, %v619
        %621 = vrot.lane.b32.xlu0 %v563, 64
        %v622 = vpop.permute.xlu0 %621
        %v625 = vsel %vm596, %v620, 0
        %627 = vmatpush.msra.mxu0 0.0
        %628 = vmatpush.msra.mxu0 0.0
        %629 = vmatpush.msra.mxu0 0.0
        %630 = vmatpush.msra.mxu0 0.0
        %631 = vmatpush.msra.mxu0 0.0
        %632 = vmatpush.msra.mxu0 0.0
        %633 = vmatpush.msra.mxu0 0.0
        %634 = vmatpush.msra.mxu0 0.0
        %635 = vmatpush.msra.mxu0 0.0
        %636 = vmatpush.msra.mxu0 0.0
        %637 = vmatpush.msra.mxu0 0.0
        %638 = vmatpush.msra.mxu0 0.0
        %639 = vmatpush.msra.mxu0 0.0
        %640 = vmatpush.msra.mxu0 0.0
        %641 = vmatpush.msra.mxu0 0.0
        %642 = vmatpush.msra.mxu0 %v622
        %643 = vmatmul.f32.gmra.mxu0 %v625
        %v644 = vpop.f32.mrf.mxu0
        %v645 = vadd.f32 0.0, %v644
        %646 = vdwg.mxu0
        %v647 = vld [vmem:[%s6] sm:$0xff]
        %v648 = vld [vmem:[%s6 + $0x8] sm:$0xff]
        %649 = vrot.lane.b32.xlu0 %v563, 112
        %v650 = vpop.permute.xlu0 %649
        %651 = vrot.lane.b32.xlu0 %v563, 80
        %v652 = vpop.permute.xlu0 %651
        %v653 = vsel %vm569, %v650, 0
        %v655 = vsel %vm569, %v652, 0
        %657 = vmatpush.xpose.msra.mxu0 0.0
        %658 = vmatpush.xpose.msra.mxu0 0.0
        %659 = vmatpush.xpose.msra.mxu0 0.0
        %660 = vmatpush.xpose.msra.mxu0 0.0
        %661 = vmatpush.xpose.msra.mxu0 0.0
        %662 = vmatpush.xpose.msra.mxu0 0.0
        %663 = vmatpush.xpose.msra.mxu0 0.0
        %664 = vmatpush.xpose.msra.mxu0 0.0
        %665 = vmatpush.xpose.msra.mxu0 0.0
        %666 = vmatpush.xpose.msra.mxu0 0.0
        %667 = vmatpush.xpose.msra.mxu0 0.0
        %668 = vmatpush.xpose.msra.mxu0 0.0
        %669 = vmatpush.xpose.msra.mxu0 0.0
        %670 = vmatpush.xpose.msra.mxu0 0.0
        %671 = vmatpush.xpose.msra.mxu0 0.0
        %672 = vmatpush.xpose.msra.mxu0 %v655
        %673 = vmatmul.f32.gmra.mxu0 %v653
        %v674 = vpop.f32.mrf.mxu0
        %v675 = vadd.f32 0.0, %v674
        %676 = vdwg.mxu0
        %v677 = vmul.f32 %v675, 0.25
        %v678 = vadd.f32 %v677, %v565
        %v679 = vsel %vm596, %v678, -inf
        %680 = vmax.xlane.f32.xlu0 %v679
        %v681 = vpop.xlane.xlu0 %680
        %v682 = vsub.f32 %v678, %v681
        %v683 = vmul.f32 %v682, 1.442695
        %v684 = vpow.pop %v683
        %v685 = vsel %vm596, %v684, 0.0
        %686 = vadd.xlane.f32.xlu0 %v685
        %v687 = vpop.xlane.xlu0 %686
        %v688 = vrcp.pop %v687
        %v689 = vmul.f32 %v687, %v688
        %v690 = vsub.f32 1.0, %v689
        %v691 = vmul.f32 %v688, %v690
        %v692 = vadd.f32 %v688, %v691
        %vm693 = vweird.f32 %v687
        %vm694 = vweird.f32 %v688
        %vm695 = vmor %vm693, %vm694
        %v696 = vsel %vm695, %v688, %v692
        %v697 = vand.u32 2147483647, %v687
        %vm698 = vcmp.eq.f32.partialorder %v697, 8.507059e+37
        %v699 = vand.u32 %v687, 2147483648
        %v700 = vor.u32 1.1754944e-38, %v699
        %v701 = vsel %vm698, %v700, %v696
        %v702 = vmul.f32 %v684, %v701
        %703 = vrot.lane.b32.xlu0 %v563, 48
        %v704 = vpop.permute.xlu0 %703
        %v707 = vsel %vm596, %v702, 0
        %709 = vmatpush.msra.mxu0 0.0
        %710 = vmatpush.msra.mxu0 0.0
        %711 = vmatpush.msra.mxu0 0.0
        %712 = vmatpush.msra.mxu0 0.0
        %713 = vmatpush.msra.mxu0 0.0
        %714 = vmatpush.msra.mxu0 0.0
        %715 = vmatpush.msra.mxu0 0.0
        %716 = vmatpush.msra.mxu0 0.0
        %717 = vmatpush.msra.mxu0 0.0
        %718 = vmatpush.msra.mxu0 0.0
        %719 = vmatpush.msra.mxu0 0.0
        %720 = vmatpush.msra.mxu0 0.0
        %721 = vmatpush.msra.mxu0 0.0
        %722 = vmatpush.msra.mxu0 0.0
        %723 = vmatpush.msra.mxu0 0.0
        %724 = vmatpush.msra.mxu0 %v704
        %725 = vmatmul.f32.gmra.mxu0 %v707
        %v726 = vpop.f32.mrf.mxu0
        %v727 = vadd.f32 0.0, %v726
        %728 = vdwg.mxu0
        %v729 = vld [vmem:[%s6 + $0x10] sm:$0xff]
        %v730 = vld [vmem:[%s6 + $0x18] sm:$0xff]
        %v732 = vsel %vm569, %v727, 0
        %734 = vmatpush.msra.mxu0 0.0
        %735 = vmatpush.msra.mxu0 0.0
        %736 = vmatpush.msra.mxu0 0.0
        %737 = vmatpush.msra.mxu0 0.0
        %738 = vmatpush.msra.mxu0 0.0
        %739 = vmatpush.msra.mxu0 0.0
        %740 = vmatpush.msra.mxu0 0.0
        %741 = vmatpush.msra.mxu0 0.0
        %742 = vmatpush.msra.mxu0 0.0
        %743 = vmatpush.msra.mxu0 0.0
        %744 = vmatpush.msra.mxu0 0.0
        %745 = vmatpush.msra.mxu0 0.0
        %746 = vmatpush.msra.mxu0 0.0
        %747 = vmatpush.msra.mxu0 0.0
        %748 = vmatpush.msra.mxu0 %v730
        %749 = vmatpush.msra.mxu0 %v729
        %750 = vmatmul.f32.gmra.mxu0 %v732
        %v751 = vpop.f32.mrf.mxu0
        %v752 = vadd.f32 0.0, %v751
        %753 = vdwg.mxu0
        %v755 = vsel %vm569, %v645, 0
        %757 = vmatpush.msra.mxu0 0.0
        %758 = vmatpush.msra.mxu0 0.0
        %759 = vmatpush.msra.mxu0 0.0
        %760 = vmatpush.msra.mxu0 0.0
        %761 = vmatpush.msra.mxu0 0.0
        %762 = vmatpush.msra.mxu0 0.0
        %763 = vmatpush.msra.mxu0 0.0
        %764 = vmatpush.msra.mxu0 0.0
        %765 = vmatpush.msra.mxu0 0.0
        %766 = vmatpush.msra.mxu0 0.0
        %767 = vmatpush.msra.mxu0 0.0
        %768 = vmatpush.msra.mxu0 0.0
        %769 = vmatpush.msra.mxu0 0.0
        %770 = vmatpush.msra.mxu0 0.0
        %771 = vmatpush.msra.mxu0 %v648
        %772 = vmatpush.msra.mxu0 %v647
        %773 = vmatmul.f32.gmra.mxu0 %v755
        %v774 = vpop.f32.mrf.mxu0
        %v775 = vadd.f32 %v752, %v774
        %776 = vdwg.mxu0
        %v777 = vld [vmem:[%s7] sm:$0x1]
        %v779 = vperm.slane %v777, 0
        %v781 = vadd.f32 %v775, %v779
        %v782 = vadd.f32 %v493, %v781
        %v783 = vld [vmem:[%s8] sm:$0x1]
        %v784 = vld [vmem:[%s9] sm:$0x1]
        %v785 = vsel %vm496, %v782, 0.0
        %786 = vadd.xlane.f32.xlu0 %v785
        %v787 = vpop.xlane.xlu0 %786
        %v788 = vmul.f32 %v787, %v506
        %v789 = vsub.f32 %v782, %v788
        %v790 = vmul.f32 %v789, %v789
        %v791 = vsel %vm496, %v790, 0.0
        %792 = vadd.xlane.f32.xlu0 %v791
        %v793 = vpop.xlane.xlu0 %792
        %v794 = vmul.f32 %v793, %v506
        %v795 = vadd.f32 %v794, 1e-05
        %v796 = vrsqrt.pop %v795
        %v797 = vmul.f32 %v796, %v795
        %v798 = vmul.f32 %v797, %v796
        %v799 = vmul.f32 0.5, %v798
        %v800 = vsub.f32 1.5, %v799
        %v801 = vmul.f32 %v796, %v800
        %vm802 = vweird.f32 %v795
        %vm803 = vweird.f32 %v796
        %vm804 = vmor %vm802, %vm803
        %v805 = vsel %vm804, %v796, %v801
        %v806 = vmul.f32 %v789, %v805
        %v808 = vperm.slane %v783, 0
        %v810 = vmul.f32 %v806, %v808
        %v812 = vperm.slane %v784, 0
        %v814 = vadd.f32 %v810, %v812
        %v815 = vld [vmem:[%s10] sm:$0xff]
        %v816 = vld [vmem:[%s10 + $0x8] sm:$0xff]
        %v817 = vld [vmem:[%s10 + $0x10] sm:$0xff]
        %v818 = vld [vmem:[%s10 + $0x18] sm:$0xff]
        %v819 = vld [vmem:[%s11] sm:$0x1]
        %v821 = vperm.slane %v819, 0
        %v824 = vsel %vm496, %v814, 0
        %826 = vmatpush.msra.mxu0 0.0
        %827 = vmatpush.msra.mxu0 0.0
        %828 = vmatpush.msra.mxu0 0.0
        %829 = vmatpush.msra.mxu0 0.0
        %830 = vmatpush.msra.mxu0 0.0
        %831 = vmatpush.msra.mxu0 0.0
        %832 = vmatpush.msra.mxu0 0.0
        %833 = vmatpush.msra.mxu0 0.0
        %834 = vmatpush.msra.mxu0 0.0
        %835 = vmatpush.msra.mxu0 0.0
        %836 = vmatpush.msra.mxu0 0.0
        %837 = vmatpush.msra.mxu0 0.0
        %838 = vmatpush.msra.mxu0 %v818
        %839 = vmatpush.msra.mxu0 %v817
        %840 = vmatpush.msra.mxu0 %v816
        %841 = vmatpush.msra.mxu0 %v815
        %842 = vmatmul.f32.gmra.mxu0 %v824
        %v843 = vpop.f32.mrf.mxu0
        %v844 = vadd.f32 %v821, %v843
        %845 = vdwg.mxu0
        %v846 = vmul.f32 %v844, %v844
        %v847 = vmul.f32 %v844, %v846
        %v848 = vmul.f32 %v847, 0.044715
        %v849 = vadd.f32 %v844, %v848
        %v850 = vmul.f32 %v849, 0.7978846
        %v851 = vtanh.pop %v850
        %v852 = vadd.f32 %v851, 1.0
        %v853 = vmul.f32 %v852, 0.5
        %v854 = vmul.f32 %v844, %v853
        %v855 = vld [vmem:[%s12] sm:$0xff]
        %v856 = vld [vmem:[%s12 + $0x8] sm:$0xff]
        %v857 = vld [vmem:[%s12 + $0x10] sm:$0xff]
        %v858 = vld [vmem:[%s12 + $0x18] sm:$0xff]
        %v859 = vld [vmem:[%s12 + $0x20] sm:$0xff]
        %v860 = vld [vmem:[%s12 + $0x28] sm:$0xff]
        %v861 = vld [vmem:[%s12 + $0x30] sm:$0xff]
        %v862 = vld [vmem:[%s12 + $0x38] sm:$0xff]
        %v863 = vld [vmem:[%s12 + $0x40] sm:$0xff]
        %v864 = vld [vmem:[%s12 + $0x48] sm:$0xff]
        %v865 = vld [vmem:[%s12 + $0x50] sm:$0xff]
        %v866 = vld [vmem:[%s12 + $0x58] sm:$0xff]
        %v867 = vld [vmem:[%s12 + $0x60] sm:$0xff]
        %v868 = vld [vmem:[%s12 + $0x68] sm:$0xff]
        %v869 = vld [vmem:[%s12 + $0x70] sm:$0xff]
        %v870 = vld [vmem:[%s12 + $0x78] sm:$0xff]
        %v871 = vld [vmem:[%s13] sm:$0x1]
        %v873 = vperm.slane %v871, 0
        %875 = vmatpush.msra.mxu0 %v870
        %876 = vmatpush.msra.mxu0 %v869
        %877 = vmatpush.msra.mxu0 %v868
        %878 = vmatpush.msra.mxu0 %v867
        %879 = vmatpush.msra.mxu0 %v866
        %880 = vmatpush.msra.mxu0 %v865
        %881 = vmatpush.msra.mxu0 %v864
        %882 = vmatpush.msra.mxu0 %v863
        %883 = vmatpush.msra.mxu0 %v862
        %884 = vmatpush.msra.mxu0 %v861
        %885 = vmatpush.msra.mxu0 %v860
        %886 = vmatpush.msra.mxu0 %v859
        %887 = vmatpush.msra.mxu0 %v858
        %888 = vmatpush.msra.mxu0 %v857
        %889 = vmatpush.msra.mxu0 %v856
        %890 = vmatpush.msra.mxu0 %v855
        %891 = vmatmul.f32.gmra.mxu0 %v854
        %v892 = vpop.f32.mrf.mxu0
        %v893 = vadd.f32 %v873, %v892
        %894 = vdwg.mxu0
        %v895 = vadd.f32 %v782, %v893
        %896 = vst.msk [vmem:[%s488] sm:$0xff] %vm496, %v895
        %s897 = sand.u32 %s337, 1
        %s898 = scalar_lea.sflag [#allocation4], %s897
        %s899 = sand.u32 %s337, 1
        %s900 = smul.addr %s899, 8
        %s901 = scalar_lea.vmem [#allocation7], %s900
        // Predicated region
        $region85: #{tpu_custom_call.1} parent=75 // pred_check
          %p902 = pneg %p347
        $region86: #{tpu_custom_call.1} parent=75 // pred_check_branch
          %904 = sbr.rel (%p902) target = $region88
        $region87: #{tpu_custom_call.1} parent=75 // pred_region
          %906 = vsyncadd %s898, 0
          %s907 = smul.addr %s30, 8
          %s908 = scalar_lea.hbm %s14, %s907
          %s910 = sshll.u32 %s901, 4
          %s911 = int_to_ptr.vmem [resolvable:$true] %s910
          %s912 = sshll.u32 %s908, 4
          %s913 = int_to_ptr.hbm [resolvable:$true] %s912
          %915 = dma.vmem_to_hbm [thread:$0]  %s911, 128, %s913, %s898
        $region88: #{tpu_custom_call.1} parent=75 // pred_fallthru
          _
      $region76: #{tpu_custom_call.1} parent=5 // pred_fallthru
        _
      %p916 = scmp.le.s32.totalorder 2, %s25
      // Predicated region
      $region89: #{tpu_custom_call.1} parent=5 // pred_check
        %p917 = pneg %p916
      $region90: #{tpu_custom_call.1} parent=5 // pred_check_branch
        %919 = sbr.rel (%p917) target = $region92
      $region91: #{tpu_custom_call.1} parent=5 // pred_region
        %s920 = ssub.s32 %s25, 2
        // Predicated region
        $region93: #{tpu_custom_call.1} parent=91 // pred_check
          %p921 = pneg %p353
        $region94: #{tpu_custom_call.1} parent=91 // pred_check_branch
          %923 = sbr.rel (%p921) target = $region96
        $region95: #{tpu_custom_call.1} parent=91 // pred_region
          %s924 = sand.u32 %s338, 1
          %s925 = scalar_lea.sflag [#allocation4], %s924
          %s926 = sand.u32 %s338, 1
          %s927 = smul.addr %s926, 8
          %s928 = scalar_lea.vmem [#allocation7], %s927
          %930 = dma.done %s925, 128
        $region96: #{tpu_custom_call.1} parent=91 // pred_fallthru
          _
      $region92: #{tpu_custom_call.1} parent=5 // pred_fallthru
        _
    $region6: #{tpu_custom_call.1} parent=1 // loop_footer
      %s29 = sadd.s32 1, %s25
    $region7: #{tpu_custom_call.1} parent=1 // loop_footer_branch
      %24 = sbr.rel target = $region3
    $region8: #{tpu_custom_call.1} parent=1 // loop_exit
      _
    %931 = vsyncpa [#allocation3], 1
    %s932 = scalar_lea.sflag [#allocation3], 1
    %933 = vsyncpa %s932, 1
    %934 = vsyncpa [#allocation6], 1
    %935 = vsyncpa [#allocation4], 1
    %s936 = scalar_lea.sflag [#allocation4], 1
    %937 = vsyncpa %s936, 1

</llo_original>
